<compile_context>
chip_gen: v7x
topology: tpu7x:2x2x1
jax: 0.10.0
libtpu: 0.0.40
codegen_flags: <defaults>
</compile_context>

<pallas_src>
import functools
import math

import jax
import jax.numpy as jnp
from jax import lax
from jax.experimental import pallas as pl
from jax.experimental.pallas import tpu as pltpu


def _round_up(x, m):
    return ((x + m - 1) // m) * m


@functools.lru_cache(maxsize=1)
def _vmem_budget_bytes():
    """Per-TensorCore VMEM budget for this kernel, with headroom."""
    try:
        info = pltpu.get_tpu_info()
        cap = int(getattr(info, "vmem_capacity_bytes", 64 * 1024 * 1024))
    except Exception:                       # fall back to the smallest (v7x) VMEM
        cap = 64 * 1024 * 1024
    # Leave ~16 MiB headroom; never ask for more than ~100 MiB even on 128-MiB parts.
    return max(32 * 1024 * 1024, min(cap - (16 << 20), 100 * 1024 * 1024))


# -----------------------------------------------------------------------------
# Attention (HAN) Pallas kernel
# -----------------------------------------------------------------------------
def _make_attention_kernel(bt, t, return_alphas):
    def kernel(x_ref, w1_ref, b1_ref, w2_ref, sent_ref, *rest):
        dp = x_ref.shape[-1]
        x2 = x_ref[...]                                    # (bt*t, dp), compute dtype

        # Weights are pre-transposed to (in, out) layout wrapper-side, so both
        # matmuls are plain row-major MXU contractions with f32 accumulation.
        u = jnp.tanh(
            jnp.dot(x2, w1_ref[...], preferred_element_type=jnp.float32)
            + b1_ref[...])
        scores = jnp.dot(u.astype(w2_ref.dtype), w2_ref[...],
                         preferred_element_type=jnp.float32)

        # Softmax over the sequence axis (PyTorch dim=1).  Splitting the fused rows
        # back into (bt, t, dp) only touches leading dims -> layout free.
        scores3 = scores.reshape(bt, t, dp)
        m = jnp.max(scores3, axis=1, keepdims=True)
        e = jnp.exp(scores3 - m)
        denom = jnp.sum(e, axis=1, keepdims=True)
        # EUP approximate reciprocal (free slot).  alphas rows sum to 1 only to
        # ~1e-3 relative accuracy; fine for the forward context vector.
        alphas = e * pl.reciprocal(denom, approx=True)

        x3 = x2.astype(jnp.float32).reshape(bt, t, dp)     # f32 weighted sum (VPU)
        sent_ref[...] = jnp.sum(alphas * x3, axis=1).astype(sent_ref.dtype)
        if return_alphas:
            rest[0][...] = alphas.reshape(bt * t, dp).astype(rest[0].dtype)

    return kernel


@functools.partial(jax.jit,
                   static_argnames=("compute_dtype", "return_alphas", "block_rows"))
def attention_forward(hidden_states, w1, b1, w2, *,
                      compute_dtype=jnp.bfloat16, return_alphas=True,
                      block_rows=4096):
    """HAN attention.

    hidden_states: (B, T, D); w1/w2: (D, D) in PyTorch (out, in) layout; b1: (D,).
    Returns (sentence (B, D) f32, alphas (B, T, D) in compute_dtype, or None).
    """
    B, T, D = hidden_states.shape
    itemsize = jnp.dtype(compute_dtype).itemsize
    Dp = _round_up(D, 128)                             # lane-dense feature axis
    # Sublane packing: bf16 packs 16 rows per vreg group, f32 packs 8.
    align = 16 if itemsize < 4 else 8
    bt_align = max(1, align // math.gcd(align, T))     # smallest bt with bt*T % align == 0

    # --- tile sizing ----------------------------------------------------------
    bt = max(1, block_rows // max(T, 1))               # batch elems fused per grid step
    if bt >= B:
        bt = B
    else:
        bt = max(bt_align, (bt // bt_align) * bt_align)

    def _vmem_bytes(btv):
        rows = btv * T
        x_tile = rows * Dp * itemsize
        sent_tile = btv * Dp * 4
        alpha_tile = rows * Dp * itemsize if return_alphas else 0
        weights = (2 * Dp * Dp + Dp) * itemsize + Dp * 4
        inter = 20 * rows * Dp                         # u, scores, e, alphas, x3 (f32)
        return 2 * (x_tile + sent_tile + alpha_tile) + 2 * weights + inter

    budget = _vmem_budget_bytes()
    while bt > 1 and _vmem_bytes(bt) > budget:
        new_bt = bt // 2
        if new_bt > bt_align:
            new_bt = (new_bt // bt_align) * bt_align
        bt = max(1, new_bt)
    # TODO(synk): for extremely long T even bt=1 may not fit VMEM; the softmax is over
    # the full sequence so this blocking scheme cannot split T further.

    # v7x has two TensorCores; the "parallel" batch axis only helps with >= 2 grid
    # steps.  Split a size-1 grid whenever each half still feeds the MXU >= 256 rows.
    if pl.cdiv(B, bt) == 1 and bt % 2 == 0 and (bt // 2) * T >= 256 \
            and ((bt // 2) * T) % align == 0:
        bt //= 2

    B_pad = _round_up(B, bt)
    G = B_pad // bt
    rows = bt * T

    # --- operand prep (single fused cast+pad pass; weights are tiny) -----------
    # TODO(synk): in production the GRU concat would emit this padded compute_dtype
    # slab directly so the attention input needs no extra HBM pass at all.
    x = jnp.pad(hidden_states.astype(compute_dtype),
                ((0, B_pad - B), (0, 0), (0, Dp - D)))
    x3 = x.reshape(G, rows, Dp)

    def _prep_w(w):                                    # PyTorch (out, in) -> padded (in, out)
        w = jnp.asarray(w, jnp.float32).T
        return jnp.pad(w, ((0, Dp - D), (0, Dp - D))).astype(compute_dtype)

    w1t = _prep_w(w1)
    w2t = _prep_w(w2)
    b1p = jnp.pad(jnp.asarray(b1, jnp.float32), (0, Dp - D)).reshape(1, Dp)

    in_specs = [
        pl.BlockSpec((None, rows, Dp), lambda i: (i, 0, 0)),   # fused (batch*seq) rows
        pl.BlockSpec((Dp, Dp), lambda i: (0, 0)),              # w1^T, VMEM-resident
        pl.BlockSpec((1, Dp), lambda i: (0, 0)),               # b1
        pl.BlockSpec((Dp, Dp), lambda i: (0, 0)),              # w2^T
    ]
    out_shape = [jax.ShapeDtypeStruct((G, bt, Dp), jnp.float32)]
    out_specs = [pl.BlockSpec((None, bt, Dp), lambda i: (i, 0, 0))]
    if return_alphas:
        # alphas return in compute_dtype (bf16 by default): dominant HBM write stream.
        out_shape.append(jax.ShapeDtypeStruct((G, rows, Dp), compute_dtype))
        out_specs.append(pl.BlockSpec((None, rows, Dp), lambda i: (i, 0, 0)))

    weight_bytes = 2 * Dp * Dp * itemsize + Dp * 4
    io_bytes = (B_pad * T * Dp * itemsize + weight_bytes + B_pad * Dp * 4
                + (B_pad * T * Dp * itemsize if return_alphas else 0))
    cost = pl.CostEstimate(
        flops=4 * B_pad * T * Dp * Dp,                 # two (rows, Dp) @ (Dp, Dp) matmuls
        transcendentals=2 * B_pad * T * Dp,            # tanh + exp
        bytes_accessed=io_bytes)

    outs = pl.pallas_call(
        _make_attention_kernel(bt, T, return_alphas),
        out_shape=tuple(out_shape) if return_alphas else out_shape[0],
        grid_spec=pltpu.PrefetchScalarGridSpec(
            num_scalar_prefetch=0,
            grid=(G,),
            in_specs=in_specs,
            out_specs=tuple(out_specs) if return_alphas else out_specs[0],
        ),
        compiler_params=pltpu.CompilerParams(
            dimension_semantics=("parallel",),         # megacore-shardable batch axis
            vmem_limit_bytes=int(budget)),
        cost_estimate=cost,
    )(x3, w1t, b1p, w2t)

    if return_alphas:
        sent_p, alphas_p = outs
        alphas = alphas_p.reshape(B_pad, T, Dp)[:B, :, :D]
    else:
        sent_p = outs
        alphas = None
    sentence = sent_p.reshape(B_pad, Dp)[:B, :D]
    return sentence, alphas


# -----------------------------------------------------------------------------
# Bidirectional GRU (plain JAX) + word_encoder forward
# -----------------------------------------------------------------------------
def _gru_cell(x_t, h_prev, w_ih, w_hh, b_ih, b_hh):
    """PyTorch-convention GRU cell.  Gate order: (reset, update, new)."""
    gi = x_t @ w_ih.T + b_ih                           # (B, 3H)
    gh = h_prev @ w_hh.T + b_hh                        # (B, 3H)
    H = h_prev.shape[-1]
    r = jax.nn.sigmoid(gi[:, :H] + gh[:, :H])
    z = jax.nn.sigmoid(gi[:, H:2 * H] + gh[:, H:2 * H])
    n = jnp.tanh(gi[:, 2 * H:] + r * gh[:, 2 * H:])
    return (1.0 - z) * n + z * h_prev


def bidirectional_gru(x, gru_params):
    """x: (B, T, E) -> (outputs (B, T, 2H), last_hidden (2, B, H))."""
    # TODO(synk): the GRU recurrence is strictly sequential over T with tiny per-step
    # matmuls; it is left to XLA (lax.scan) rather than forced into a Pallas kernel.
    fwd, bwd = gru_params
    B = x.shape[0]
    H = fwd[1].shape[-1]
    xs = jnp.swapaxes(x, 0, 1)                         # (T, B, E)
    h0 = jnp.zeros((B, H), x.dtype)

    def run(params, seq):
        w_ih, w_hh, b_ih, b_hh = params

        def step(h, x_t):
            h_new = _gru_cell(x_t, h, w_ih, w_hh, b_ih, b_hh)
            return h_new, h_new

        return lax.scan(step, h0, seq)

    h_f, ys_f = run(fwd, xs)
    h_b, ys_b = run(bwd, xs[::-1])
    out = jnp.concatenate([ys_f, ys_b[::-1]], axis=-1)  # (T, B, 2H)
    return jnp.swapaxes(out, 0, 1), jnp.stack([h_f, h_b], axis=0)


def word_encoder_forward(inputs_embedded, hid_state, gru_params, w1, b1, w2,
                         compute_dtype=jnp.bfloat16):
    """Forward of `word_encoder`: bidirectional GRU (XLA) + HAN attention (Pallas)."""
    # TODO(synk): pack_padded_sequence / pad_packed_sequence (ragged batches) is not
    # modelled; all sequences are assumed full length.  `hid_state` is accepted for
    # signature parity but -- exactly like the PyTorch module -- not passed to the GRU.
    del hid_state
    output_gru, last_hidden = bidirectional_gru(inputs_embedded, gru_params)
    # Note: attention weights are returned in compute_dtype (bf16 by default) to halve
    # the kernel's HBM writeback; cast to f32 at the consumer if needed.
    sentence, alphas = attention_forward(output_gru, w1, b1, w2,
                                         compute_dtype=compute_dtype)
    return sentence[None, ...], [last_hidden, alphas]


# -----------------------------------------------------------------------------
# Pure-JAX reference for the attention block
# -----------------------------------------------------------------------------
def _attention_reference(hidden_states, w1, b1, w2):
    u = jnp.tanh(jnp.einsum("btd,od->bto", hidden_states, w1) + b1)
    scores = jnp.einsum("btd,od->bto", u, w2)
    alphas = jax.nn.softmax(scores, axis=1)
    sentence = jnp.sum(alphas * hidden_states, axis=1)
    return sentence, alphas


if __name__ == "__main__":
    hidden_size = 16
    embedding_size = 32
    B, T = 2, 8
    D = 2 * hidden_size

    key = jax.random.PRNGKey(0)
    keys = jax.random.split(key, 14)

    def uniform(k, shape, bound):
        return jax.random.uniform(k, shape, minval=-bound, maxval=bound,
                                  dtype=jnp.float32)

    gb = 1.0 / (hidden_size ** 0.5)

    def gru_dir(ks):
        return (uniform(ks[0], (3 * hidden_size, embedding_size), gb),
                uniform(ks[1], (3 * hidden_size, hidden_size), gb),
                uniform(ks[2], (3 * hidden_size,), gb),
                uniform(ks[3], (3 * hidden_size,), gb))

    gru_params = (gru_dir(keys[0:4]), gru_dir(keys[4:8]))

    ab = 1.0 / (D ** 0.5)
    w1 = uniform(keys[8], (D, D), ab)
    b1 = uniform(keys[9], (D,), ab)
    w2 = uniform(keys[10], (D, D), ab)

    inputs_embedded = jax.random.normal(keys[11], (B, T, embedding_size),
                                        dtype=jnp.float32)
    hid_state = jnp.zeros((2, B, hidden_size), jnp.float32)

    # Full word_encoder forward (GRU in XLA, attention in Pallas, bf16 matmuls).
    enc_out, (last_hidden, att_weights) = word_encoder_forward(
        inputs_embedded, hid_state, gru_params, w1, b1, w2)
    jax.block_until_ready((enc_out, last_hidden, att_weights))
    assert enc_out.shape == (1, B, D)
    assert att_weights.shape == (B, T, D)
    assert last_hidden.shape == (2, B, hidden_size)

    # Correctness of the Pallas attention kernel against a pure-JAX reference.
    hidden_states, _ = bidirectional_gru(inputs_embedded, gru_params)
    ref_sent, ref_alphas = _attention_reference(hidden_states, w1, b1, w2)

    # f32 matmul path (tight check).
    sent32, alphas32 = attention_forward(hidden_states, w1, b1, w2,
                                         compute_dtype=jnp.float32)
    jax.block_until_ready((sent32, alphas32))
    assert jnp.allclose(sent32, ref_sent, atol=1e-2, rtol=1e-2)
    assert jnp.allclose(alphas32, ref_alphas, atol=1e-2, rtol=1e-2)

    # bf16 matmul path (recommended perf configuration on v6e/v7x).
    sent16, alphas16 = attention_forward(hidden_states, w1, b1, w2,
                                         compute_dtype=jnp.bfloat16)
    jax.block_until_ready((sent16, alphas16))
    assert jnp.allclose(sent16, ref_sent, atol=3e-2, rtol=3e-2)
    assert jnp.allclose(alphas16.astype(jnp.float32), ref_alphas,
                        atol=3e-2, rtol=3e-2)

    # Sentence-only variant (skips the alphas HBM writeback entirely).
    sent_only, no_alphas = attention_forward(hidden_states, w1, b1, w2,
                                             compute_dtype=jnp.bfloat16,
                                             return_alphas=False)
    jax.block_until_ready(sent_only)
    assert no_alphas is None
    assert jnp.allclose(sent_only, ref_sent, atol=3e-2, rtol=3e-2)

    # Multi-step grid with batch padding (bt < B, B_pad > B), f32 path.
    B2, T2 = 20, 16
    hs2 = jax.random.normal(keys[12], (B2, T2, D), dtype=jnp.float32) * 0.5
    ref_s2, ref_a2 = _attention_reference(hs2, w1, b1, w2)
    s2, a2 = attention_forward(hs2, w1, b1, w2, compute_dtype=jnp.float32,
                               block_rows=64)
    jax.block_until_ready((s2, a2))
    assert jnp.allclose(s2, ref_s2, atol=1e-2, rtol=1e-2)
    assert jnp.allclose(a2, ref_a2, atol=1e-2, rtol=1e-2)

    # Size-1 grid split into >= 2 steps (keeps both v7x TensorCores busy).
    B3, T3 = 8, 64
    hs3 = jax.random.normal(keys[13], (B3, T3, D), dtype=jnp.float32) * 0.5
    ref_s3, ref_a3 = _attention_reference(hs3, w1, b1, w2)
    s3, a3 = attention_forward(hs3, w1, b1, w2, compute_dtype=jnp.bfloat16)
    jax.block_until_ready((s3, a3))
    assert jnp.allclose(s3, ref_s3, atol=3e-2, rtol=3e-2)
    assert jnp.allclose(a3.astype(jnp.float32), ref_a3, atol=3e-2, rtol=3e-2)

    print("KERNEL_OK")
</pallas_src>

<mosaic_0001>
module attributes {stable_mosaic.version = 11 : i64} {
  func.func @kernel(%arg0: i32, %arg1: memref<1x16x128xbf16, #tpu.memory_space<vmem>>, %arg2: memref<128x128xbf16, #tpu.memory_space<vmem>>, %arg3: memref<1x128xf32, #tpu.memory_space<vmem>>, %arg4: memref<128x128xbf16, #tpu.memory_space<vmem>>, %arg5: memref<1x2x128xf32, #tpu.memory_space<vmem>>, %arg6: memref<1x16x128xbf16, #tpu.memory_space<vmem>>) attributes {dimension_semantics = [#tpu.dimension_semantics<parallel>], iteration_bounds = array<i64: 1>, scalar_prefetch = 0 : i64, scratch_operands = 0 : i64, tpu.core_type = #tpu.core_type<tc>, window_params = [{transform_indices = @transform_0, window_bounds = array<i64: 1, 16, 128>}, {pipeline_mode = #tpu.pipeline_mode<synchronous>, transform_indices = @transform_1, window_bounds = array<i64: 128, 128>}, {pipeline_mode = #tpu.pipeline_mode<synchronous>, transform_indices = @transform_2, window_bounds = array<i64: 1, 128>}, {pipeline_mode = #tpu.pipeline_mode<synchronous>, transform_indices = @transform_3, window_bounds = array<i64: 128, 128>}, {transform_indices = @transform_4, window_bounds = array<i64: 1, 2, 128>}, {transform_indices = @transform_5, window_bounds = array<i64: 1, 16, 128>}]} {
    %c0 = arith.constant 0 : index
    %c0_0 = arith.constant 0 : index
    %c0_1 = arith.constant 0 : index
    %0 = vector.load %arg1[%c0, %c0_0, %c0_1] : memref<1x16x128xbf16, #tpu.memory_space<vmem>>, vector<1x16x128xbf16>
    %1 = vector.shape_cast %0 : vector<1x16x128xbf16> to vector<16x128xbf16>
    %c0_2 = arith.constant 0 : index
    %c0_3 = arith.constant 0 : index
    %2 = vector.load %arg2[%c0_2, %c0_3] : memref<128x128xbf16, #tpu.memory_space<vmem>>, vector<128x128xbf16>
    %cst = arith.constant dense<0.000000e+00> : vector<16x128xf32>
    %3 = tpu.matmul %1, %2, %cst {dimension_numbers = #tpu.dot_dimension_numbers<[1], [0], [0], [1], [0, 0, 1, 1], [], []>} : vector<16x128xbf16>, vector<128x128xbf16>, vector<16x128xf32> -> vector<16x128xf32>
    %c0_4 = arith.constant 0 : index
    %c0_5 = arith.constant 0 : index
    %4 = vector.load %arg3[%c0_4, %c0_5] : memref<1x128xf32, #tpu.memory_space<vmem>>, vector<1x128xf32>
    %5 = vector.broadcast %4 : vector<1x128xf32> to vector<16x128xf32>
    %6 = arith.addf %3, %5 : vector<16x128xf32>
    %7 = math.tanh %6 : vector<16x128xf32>
    %8 = arith.truncf %7 : vector<16x128xf32> to vector<16x128xbf16>
    %c0_6 = arith.constant 0 : index
    %c0_7 = arith.constant 0 : index
    %9 = vector.load %arg4[%c0_6, %c0_7] : memref<128x128xbf16, #tpu.memory_space<vmem>>, vector<128x128xbf16>
    %cst_8 = arith.constant dense<0.000000e+00> : vector<16x128xf32>
    %10 = tpu.matmul %8, %9, %cst_8 {dimension_numbers = #tpu.dot_dimension_numbers<[1], [0], [0], [1], [0, 0, 1, 1], [], []>} : vector<16x128xbf16>, vector<128x128xbf16>, vector<16x128xf32> -> vector<16x128xf32>
    %11 = vector.shape_cast %10 : vector<16x128xf32> to vector<2x8x128xf32>
    %cst_9 = arith.constant dense<0xFF800000> : vector<2x128xf32>
    %12 = vector.multi_reduction <maximumf>, %11, %cst_9 [1] : vector<2x8x128xf32> to vector<2x128xf32>
    %13 = vector.shape_cast %12 : vector<2x128xf32> to vector<2x1x128xf32>
    %14 = vector.broadcast %13 : vector<2x1x128xf32> to vector<2x8x128xf32>
    %15 = arith.subf %11, %14 : vector<2x8x128xf32>
    %16 = math.exp %15 : vector<2x8x128xf32>
    %cst_10 = arith.constant dense<0.000000e+00> : vector<2x128xf32>
    %17 = vector.multi_reduction <add>, %16, %cst_10 [1] : vector<2x8x128xf32> to vector<2x128xf32>
    %18 = vector.shape_cast %17 : vector<2x128xf32> to vector<2x1x128xf32>
    %19 = tpu.reciprocal %18 {approx = true} : vector<2x1x128xf32> -> vector<2x1x128xf32>
    %20 = vector.broadcast %19 : vector<2x1x128xf32> to vector<2x8x128xf32>
    %21 = arith.mulf %16, %20 : vector<2x8x128xf32>
    %22 = arith.extf %1 : vector<16x128xbf16> to vector<16x128xf32>
    %23 = vector.shape_cast %22 : vector<16x128xf32> to vector<2x8x128xf32>
    %24 = arith.mulf %21, %23 : vector<2x8x128xf32>
    %cst_11 = arith.constant dense<0.000000e+00> : vector<2x128xf32>
    %25 = vector.multi_reduction <add>, %24, %cst_11 [1] : vector<2x8x128xf32> to vector<2x128xf32>
    %c0_12 = arith.constant 0 : index
    %c0_13 = arith.constant 0 : index
    %c0_14 = arith.constant 0 : index
    %26 = vector.load %arg5[%c0_12, %c0_13, %c0_14] : memref<1x2x128xf32, #tpu.memory_space<vmem>>, vector<1x2x128xf32>
    %27 = vector.shape_cast %26 : vector<1x2x128xf32> to vector<2x128xf32>
    %28 = vector.shape_cast %25 : vector<2x128xf32> to vector<1x2x128xf32>
    tpu.vector_store %arg5[%c0_12, %c0_13, %c0_14], %28 {strides = array<i32>} : memref<1x2x128xf32, #tpu.memory_space<vmem>>, vector<1x2x128xf32>,
    %29 = vector.shape_cast %21 : vector<2x8x128xf32> to vector<16x128xf32>
    %30 = arith.truncf %29 : vector<16x128xf32> to vector<16x128xbf16>
    %c0_15 = arith.constant 0 : index
    %c0_16 = arith.constant 0 : index
    %c0_17 = arith.constant 0 : index
    %31 = vector.load %arg6[%c0_15, %c0_16, %c0_17] : memref<1x16x128xbf16, #tpu.memory_space<vmem>>, vector<1x16x128xbf16>
    %32 = vector.shape_cast %31 : vector<1x16x128xbf16> to vector<16x128xbf16>
    %33 = vector.shape_cast %30 : vector<16x128xbf16> to vector<1x16x128xbf16>
    tpu.vector_store %arg6[%c0_15, %c0_16, %c0_17], %33 {strides = array<i32>} : memref<1x16x128xbf16, #tpu.memory_space<vmem>>, vector<1x16x128xbf16>,
    return
  }
  func.func @transform_0(%arg0: i32) -> (i32, i32, i32) {
    %c0_i32 = arith.constant 0 : i32
    %c0_i32_0 = arith.constant 0 : i32
    %c0_i32_1 = arith.constant 0 : i32
    return %arg0, %c0_i32, %c0_i32_0 : i32, i32, i32
  }
  func.func @transform_1(%arg0: i32) -> (i32, i32) {
    %c0_i32 = arith.constant 0 : i32
    %c0_i32_0 = arith.constant 0 : i32
    %c0_i32_1 = arith.constant 0 : i32
    return %c0_i32, %c0_i32_0 : i32, i32
  }
  func.func @transform_2(%arg0: i32) -> (i32, i32) {
    %c0_i32 = arith.constant 0 : i32
    %c0_i32_0 = arith.constant 0 : i32
    %c0_i32_1 = arith.constant 0 : i32
    return %c0_i32, %c0_i32_0 : i32, i32
  }
  func.func @transform_3(%arg0: i32) -> (i32, i32) {
    %c0_i32 = arith.constant 0 : i32
    %c0_i32_0 = arith.constant 0 : i32
    %c0_i32_1 = arith.constant 0 : i32
    return %c0_i32, %c0_i32_0 : i32, i32
  }
  func.func @transform_4(%arg0: i32) -> (i32, i32, i32) {
    %c0_i32 = arith.constant 0 : i32
    %c0_i32_0 = arith.constant 0 : i32
    %c0_i32_1 = arith.constant 0 : i32
    return %arg0, %c0_i32, %c0_i32_0 : i32, i32, i32
  }
  func.func @transform_5(%arg0: i32) -> (i32, i32, i32) {
    %c0_i32 = arith.constant 0 : i32
    %c0_i32_0 = arith.constant 0 : i32
    %c0_i32_1 = arith.constant 0 : i32
    return %arg0, %c0_i32, %c0_i32_0 : i32, i32, i32
  }
}

</mosaic_0001>

<llo_original>
// kernel: attention_forward.1
$region0: #{attention_forward.1}
  #allocation0 [shape = 'u32[]', space=smem, size = 0x4, offset = 0x4, fixed_abs, tag = 'smem constant byte address 0x4 - core index']
  #allocation1 [shape = 'u32[144,128]{1,0:T(1,128)}', space=vmem, size = 0x12000, scoped, tag = 'internal scratch']
  %s0 = inlined_call_operand.vmem [shape: bf16[1,16,128], index: 0, kind: input, shape index: {}]
  %s1 = inlined_call_operand.vmem [shape: bf16[128,128], index: 1, kind: input, shape index: {}]
  %s2 = inlined_call_operand.vmem [shape: f32[1,128], index: 2, kind: input, shape index: {}]
  %s3 = inlined_call_operand.vmem [shape: bf16[128,128], index: 3, kind: input, shape index: {}]
  %s4 = inlined_call_operand.hbm [shape: f32[1,2,128], index: 4, kind: output, shape index: {0}]
  %s5 = inlined_call_operand.hbm [shape: bf16[1,16,128], index: 5, kind: output, shape index: {1}]
  %6 = xla_tuple %s4, %s5
  %s7 = sld [smem:[#allocation0]]
  $region34: #{attention_forward.1} parent=0
    _
  %s9 = ssub.s32 1, %s7
  %s10 = scalar_select 0, %s9, %s7
  $region1: #{attention_forward.1} parent=0
    #allocation2 [shape = 'u8[1024]{0}', space=vmem, size = 0x400, scoped, tag = 'output window, operand 0, single buffered']
    #allocation3 [shape = 's32[1]{0}', space=sflag, size = 0x4, scoped, tag = 'scoped memory for attention_forward.1']
    #allocation4 [shape = 'u8[4096]{0}', space=vmem, size = 0x1000, scoped, tag = 'output window, operand 1, single buffered']
    #allocation5 [shape = 's32[1]{0}', space=sflag, size = 0x4, scoped, tag = 'scoped memory for attention_forward.1']
    %11 = vsyncpa [#allocation3], 0
    %12 = vsyncpa [#allocation5], 0
    // Predicated region
    $region2: #{attention_forward.1} parent=1 // pred_check
      _
    $region3: #{attention_forward.1} parent=1 // pred_check_branch
      %14 = sbr.rel (0) target = $region5
    $region4: #{attention_forward.1} parent=1 // pred_region
      _
    $region5: #{attention_forward.1} parent=1 // pred_fallthru
      _
    // Predicated region
    $region6: #{attention_forward.1} parent=1 // pred_check
      _
    $region7: #{attention_forward.1} parent=1 // pred_check_branch
      %16 = sbr.rel (0) target = $region9
    $region8: #{attention_forward.1} parent=1 // pred_region
      _
    $region9: #{attention_forward.1} parent=1 // pred_fallthru
      _
    // Predicated region
    $region10: #{attention_forward.1} parent=1 // pred_check
      _
    $region11: #{attention_forward.1} parent=1 // pred_check_branch
      %18 = sbr.rel (0) target = $region13
    $region12: #{attention_forward.1} parent=1 // pred_region
      _
    $region13: #{attention_forward.1} parent=1 // pred_fallthru
      _
    // Predicated region
    $region14: #{attention_forward.1} parent=1 // pred_check
      _
    $region15: #{attention_forward.1} parent=1 // pred_check_branch
      %20 = sbr.rel (0) target = $region17
    $region16: #{attention_forward.1} parent=1 // pred_region
      _
    $region17: #{attention_forward.1} parent=1 // pred_fallthru
      _
    %v22 = vld [vmem:[%s0] sm:$0xf]
    %v23 = vld [vmem:[%s0 + $0x4] sm:$0xf]
    %v24 = vld [vmem:[%s1] sm:$0xf]
    %v25 = vld [vmem:[%s1 + $0x4] sm:$0xf]
    %v26 = vld [vmem:[%s1 + $0x8] sm:$0xf]
    %v27 = vld [vmem:[%s1 + $0xc] sm:$0xf]
    %v28 = vld [vmem:[%s1 + $0x10] sm:$0xf]
    %v29 = vld [vmem:[%s1 + $0x14] sm:$0xf]
    %v30 = vld [vmem:[%s1 + $0x18] sm:$0xf]
    %v31 = vld [vmem:[%s1 + $0x1c] sm:$0xf]
    %v32 = vld [vmem:[%s1 + $0x20] sm:$0xf]
    %v33 = vld [vmem:[%s1 + $0x24] sm:$0xf]
    %v34 = vld [vmem:[%s1 + $0x28] sm:$0xf]
    %v35 = vld [vmem:[%s1 + $0x2c] sm:$0xf]
    %v36 = vld [vmem:[%s1 + $0x30] sm:$0xf]
    %v37 = vld [vmem:[%s1 + $0x34] sm:$0xf]
    %v38 = vld [vmem:[%s1 + $0x38] sm:$0xf]
    %v39 = vld [vmem:[%s1 + $0x3c] sm:$0xf]
    %v40 = vld [vmem:[%s2] sm:$0x1]
    %v42 = vlaneseq
    %v43 = vshrl.u32 %v42, 7
    %v44 = vsub.s32 0, %v43
    %v45 = vrot.slane %v40, %v44
    %v49 = vunpack.c.l.b16 %v22
    %v50 = vunpack.c.l.b16 %v23
    %v51 = vpack.c.b16 %v50, %v49
    %v69 = vunpack.c.l.b16 %v24
    %v70 = vunpack.c.l.b16 %v25
    %v71 = vunpack.c.l.b16 %v26
    %v72 = vunpack.c.l.b16 %v27
    %v73 = vunpack.c.l.b16 %v28
    %v74 = vunpack.c.l.b16 %v29
    %v75 = vunpack.c.l.b16 %v30
    %v76 = vunpack.c.l.b16 %v31
    %v77 = vunpack.c.l.b16 %v32
    %v78 = vunpack.c.l.b16 %v33
    %v79 = vunpack.c.l.b16 %v34
    %v80 = vunpack.c.l.b16 %v35
    %v81 = vunpack.c.l.b16 %v36
    %v82 = vunpack.c.l.b16 %v37
    %v83 = vunpack.c.l.b16 %v38
    %v84 = vunpack.c.l.b16 %v39
    %v85 = vpack.c.b16 %v70, %v69
    %v86 = vpack.c.b16 %v72, %v71
    %v87 = vpack.c.b16 %v74, %v73
    %v88 = vpack.c.b16 %v76, %v75
    %v89 = vpack.c.b16 %v78, %v77
    %v90 = vpack.c.b16 %v80, %v79
    %v91 = vpack.c.b16 %v82, %v81
    %v92 = vpack.c.b16 %v84, %v83
    %101 = vmatprep.subr.bf16.mxu0 0
    %102 = vmatpush1.bf16.msra.mxu0 %v85
    %103 = vmatprep.subr.bf16.mxu0 0
    %104 = vmatpush1.bf16.msra.mxu0 %v86
    %105 = vmatprep.subr.bf16.mxu0 0
    %106 = vmatpush1.bf16.msra.mxu0 %v87
    %107 = vmatprep.subr.bf16.mxu0 0
    %108 = vmatpush1.bf16.msra.mxu0 %v88
    %109 = vmatprep.subr.bf16.mxu0 0
    %110 = vmatpush1.bf16.msra.mxu0 %v89
    %111 = vmatprep.subr.bf16.mxu0 0
    %112 = vmatpush1.bf16.msra.mxu0 %v90
    %113 = vmatprep.subr.bf16.mxu0 0
    %114 = vmatpush1.bf16.msra.mxu0 %v91
    %115 = vmatprep.subr.bf16.mxu0 0
    %116 = vmatpush1.bf16.msra.mxu0 %v92
    %117 = vmatprep.subr.bf16.mxu0 0
    %118 = vmatpush1.bf16.msra.mxu0 0
    %119 = vmatprep.subr.bf16.mxu0 0
    %120 = vmatpush1.bf16.msra.mxu0 0
    %121 = vmatprep.subr.bf16.mxu0 0
    %122 = vmatpush1.bf16.msra.mxu0 0
    %123 = vmatprep.subr.bf16.mxu0 0
    %124 = vmatpush1.bf16.msra.mxu0 0
    %125 = vmatprep.subr.bf16.mxu0 0
    %126 = vmatpush1.bf16.msra.mxu0 0
    %127 = vmatprep.subr.bf16.mxu0 0
    %128 = vmatpush1.bf16.msra.mxu0 0
    %129 = vmatprep.subr.bf16.mxu0 0
    %130 = vmatpush1.bf16.msra.mxu0 0
    %131 = vmatprep.subr.bf16.mxu0 0
    %132 = vmatpush1.bf16.msra.mxu0 0
    %133 = vmatprep.mubr.bf16.mxu0 0
    %134 = vmatmul.mubr.bf16.gmra.mrb[0].mxu0 %v51
    %v135 = vpop.f32.mrb[0].mxu0
    %v136 = vadd.f32 %v45, %v135
    %v137 = vpop.f32.mrb[0].mxu0
    %v138 = vpop.f32.mrb[0].mxu0
    %v139 = vadd.f32 %v45, %v138
    %v140 = vpop.f32.mrb[0].mxu0
    %141 = vdwg.mxu0
    %v142 = vtanh.pop %v136
    %v143 = vtanh.pop %v139
    %v144 = vpack.c.bf16 %v143, %v142
    %v145 = vld [vmem:[%s3] sm:$0xf]
    %v146 = vld [vmem:[%s3 + $0x4] sm:$0xf]
    %v147 = vld [vmem:[%s3 + $0x8] sm:$0xf]
    %v148 = vld [vmem:[%s3 + $0xc] sm:$0xf]
    %v149 = vld [vmem:[%s3 + $0x10] sm:$0xf]
    %v150 = vld [vmem:[%s3 + $0x14] sm:$0xf]
    %v151 = vld [vmem:[%s3 + $0x18] sm:$0xf]
    %v152 = vld [vmem:[%s3 + $0x1c] sm:$0xf]
    %v153 = vld [vmem:[%s3 + $0x20] sm:$0xf]
    %v154 = vld [vmem:[%s3 + $0x24] sm:$0xf]
    %v155 = vld [vmem:[%s3 + $0x28] sm:$0xf]
    %v156 = vld [vmem:[%s3 + $0x2c] sm:$0xf]
    %v157 = vld [vmem:[%s3 + $0x30] sm:$0xf]
    %v158 = vld [vmem:[%s3 + $0x34] sm:$0xf]
    %v159 = vld [vmem:[%s3 + $0x38] sm:$0xf]
    %v160 = vld [vmem:[%s3 + $0x3c] sm:$0xf]
    %v177 = vunpack.c.l.b16 %v145
    %v178 = vunpack.c.l.b16 %v146
    %v179 = vunpack.c.l.b16 %v147
    %v180 = vunpack.c.l.b16 %v148
    %v181 = vunpack.c.l.b16 %v149
    %v182 = vunpack.c.l.b16 %v150
    %v183 = vunpack.c.l.b16 %v151
    %v184 = vunpack.c.l.b16 %v152
    %v185 = vunpack.c.l.b16 %v153
    %v186 = vunpack.c.l.b16 %v154
    %v187 = vunpack.c.l.b16 %v155
    %v188 = vunpack.c.l.b16 %v156
    %v189 = vunpack.c.l.b16 %v157
    %v190 = vunpack.c.l.b16 %v158
    %v191 = vunpack.c.l.b16 %v159
    %v192 = vunpack.c.l.b16 %v160
    %v193 = vpack.c.b16 %v178, %v177
    %v194 = vpack.c.b16 %v180, %v179
    %v195 = vpack.c.b16 %v182, %v181
    %v196 = vpack.c.b16 %v184, %v183
    %v197 = vpack.c.b16 %v186, %v185
    %v198 = vpack.c.b16 %v188, %v187
    %v199 = vpack.c.b16 %v190, %v189
    %v200 = vpack.c.b16 %v192, %v191
    %209 = vmatprep.subr.bf16.mxu0 0
    %210 = vmatpush1.bf16.msra.mxu0 %v193
    %211 = vmatprep.subr.bf16.mxu0 0
    %212 = vmatpush1.bf16.msra.mxu0 %v194
    %213 = vmatprep.subr.bf16.mxu0 0
    %214 = vmatpush1.bf16.msra.mxu0 %v195
    %215 = vmatprep.subr.bf16.mxu0 0
    %216 = vmatpush1.bf16.msra.mxu0 %v196
    %217 = vmatprep.subr.bf16.mxu0 0
    %218 = vmatpush1.bf16.msra.mxu0 %v197
    %219 = vmatprep.subr.bf16.mxu0 0
    %220 = vmatpush1.bf16.msra.mxu0 %v198
    %221 = vmatprep.subr.bf16.mxu0 0
    %222 = vmatpush1.bf16.msra.mxu0 %v199
    %223 = vmatprep.subr.bf16.mxu0 0
    %224 = vmatpush1.bf16.msra.mxu0 %v200
    %225 = vmatprep.subr.bf16.mxu0 0
    %226 = vmatpush1.bf16.msra.mxu0 0
    %227 = vmatprep.subr.bf16.mxu0 0
    %228 = vmatpush1.bf16.msra.mxu0 0
    %229 = vmatprep.subr.bf16.mxu0 0
    %230 = vmatpush1.bf16.msra.mxu0 0
    %231 = vmatprep.subr.bf16.mxu0 0
    %232 = vmatpush1.bf16.msra.mxu0 0
    %233 = vmatprep.subr.bf16.mxu0 0
    %234 = vmatpush1.bf16.msra.mxu0 0
    %235 = vmatprep.subr.bf16.mxu0 0
    %236 = vmatpush1.bf16.msra.mxu0 0
    %237 = vmatprep.subr.bf16.mxu0 0
    %238 = vmatpush1.bf16.msra.mxu0 0
    %239 = vmatprep.subr.bf16.mxu0 0
    %240 = vmatpush1.bf16.msra.mxu0 0
    %241 = vmatprep.mubr.bf16.mxu0 0
    %242 = vmatmul.mubr.bf16.gmra.mrb[0].mxu0 %v144
    %v243 = vpop.f32.mrb[0].mxu0
    %v244 = vadd.f32 0.0, %v243
    %v245 = vpop.f32.mrb[0].mxu0
    %v246 = vpop.f32.mrb[0].mxu0
    %v247 = vadd.f32 0.0, %v246
    %v248 = vpop.f32.mrb[0].mxu0
    %249 = vdwg.mxu0
    %v250 = vrot.slane %v244, 4
    %v251 = vmax.f32 %v244, %v250
    %v252 = vrot.slane %v251, 2
    %v253 = vmax.f32 %v251, %v252
    %v254 = vrot.slane %v253, 1
    %v255 = vmax.f32 %v253, %v254
    %v256 = vrot.slane %v247, 4
    %v257 = vmax.f32 %v247, %v256
    %v258 = vrot.slane %v257, 2
    %v259 = vmax.f32 %v257, %v258
    %v260 = vrot.slane %v259, 1
    %v261 = vmax.f32 %v259, %v260
    %v262 = vsub.f32 %v244, %v255
    %v263 = vsub.f32 %v247, %v261
    %v264 = vmul.f32 %v262, 1.442695
    %v265 = vpow.pop %v264
    %v266 = vmul.f32 %v263, 1.442695
    %v267 = vpow.pop %v266
    %v268 = vrot.slane %v265, 4
    %v269 = vadd.f32 %v265, %v268
    %v270 = vrot.slane %v269, 2
    %v271 = vadd.f32 %v269, %v270
    %v272 = vrot.slane %v271, 1
    %v273 = vadd.f32 %v271, %v272
    %v274 = vrot.slane %v267, 4
    %v275 = vadd.f32 %v267, %v274
    %v276 = vrot.slane %v275, 2
    %v277 = vadd.f32 %v275, %v276
    %v278 = vrot.slane %v277, 1
    %v279 = vadd.f32 %v277, %v278
    %v280 = vrcp.pop %v273
    %v281 = vrcp.pop %v279
    %v282 = vmul.f32 %v265, %v280
    %v283 = vmul.f32 %v267, %v281
    %v284 = vunpack.c.l.bf16 %v22
    %v285 = vunpack.c.l.bf16 %v23
    %v286 = vmul.f32 %v282, %v284
    %v287 = vmul.f32 %v283, %v285
    %v288 = vrot.slane %v286, 4
    %v289 = vadd.f32 %v286, %v288
    %v290 = vrot.slane %v289, 2
    %v291 = vadd.f32 %v289, %v290
    %v292 = vrot.slane %v291, 1
    %v293 = vadd.f32 %v291, %v292
    %v294 = vrot.slane %v287, 4
    %v295 = vadd.f32 %v287, %v294
    %v296 = vrot.slane %v295, 2
    %v297 = vadd.f32 %v295, %v296
    %v298 = vrot.slane %v297, 1
    %v299 = vadd.f32 %v297, %v298
    %vm302 = vcmask 1041409
    %v303 = vsel %vm302, %v299, %v293
    %305 = vst [vmem:[#allocation2] sm:$0x3] %v303
    %v306 = vpack.c.bf16 %v283, %v282
    %v308 = vunpack.c.l.b16 %v306
    %v309 = vunpack.c.h.b16 %v306
    %v310 = vpack.c.b16 %v308, %v308
    %v311 = vpack.c.b16 %v309, %v309
    %314 = vst [vmem:[#allocation4] sm:$0xf] %v310
    %315 = vst [vmem:[#allocation4 + $0x4] sm:$0xf] %v311
    // Predicated region
    $region18: #{attention_forward.1} parent=1 // pred_check
      _
    $region19: #{attention_forward.1} parent=1 // pred_check_branch
      %317 = sbr.rel (0) target = $region21
    $region20: #{attention_forward.1} parent=1 // pred_region
      %s319 = ssub.s32 32, 32
      %320 = vsyncadd [#allocation3], %s319
      %s322 = sshll.u32 [#allocation2], 4
      %s323 = int_to_ptr.vmem [resolvable:$true] %s322
      %325 = dma.vmem_to_hbm [thread:$0]  %s323, 32, %s4, [#allocation3]
    $region21: #{attention_forward.1} parent=1 // pred_fallthru
      _
    // Predicated region
    $region22: #{attention_forward.1} parent=1 // pred_check
      _
    $region23: #{attention_forward.1} parent=1 // pred_check_branch
      %327 = sbr.rel (0) target = $region25
    $region24: #{attention_forward.1} parent=1 // pred_region
      %s329 = ssub.s32 128, 128
      %330 = vsyncadd [#allocation5], %s329
      %s331 = sshll.u32 [#allocation4], 4
      %s332 = int_to_ptr.vmem [resolvable:$true] %s331
      %337 = dma.vmem_to_hbm [thread:$0]  %s332, 128, %s5, [#allocation5], 64, 64, 4
    $region25: #{attention_forward.1} parent=1 // pred_fallthru
      _
    // Predicated region
    $region26: #{attention_forward.1} parent=1 // pred_check
      _
    $region27: #{attention_forward.1} parent=1 // pred_check_branch
      %339 = sbr.rel (0) target = $region29
    $region28: #{attention_forward.1} parent=1 // pred_region
      %340 = dma.done [#allocation3], 32
    $region29: #{attention_forward.1} parent=1 // pred_fallthru
      _
    // Predicated region
    $region30: #{attention_forward.1} parent=1 // pred_check
      _
    $region31: #{attention_forward.1} parent=1 // pred_check_branch
      %342 = sbr.rel (0) target = $region33
    $region32: #{attention_forward.1} parent=1 // pred_region
      %343 = dma.done [#allocation5], 128
    $region33: #{attention_forward.1} parent=1 // pred_fallthru
      _
    %344 = vsyncpa [#allocation3], 1
    %345 = vsyncpa [#allocation5], 1

</llo_original>
